<compile_context>
chip_gen: v5e
topology: v5e:2x2
jax: 0.10.0
libtpu: 0.0.40
codegen_flags: <defaults>
</compile_context>

<pallas_src>
import jax
import jax.numpy as jnp
from jax.experimental import pallas as pl
from jax.experimental.pallas import tpu as pltpu

_BN_EPS = 1e-5
_LANE = 128


def _pad_to(n, m=_LANE):
    return ((n + m - 1) // m) * m


def _full_spec(shape):
    # Whole (already lane-padded) array as a single block; grid=() -> no args.
    return pl.BlockSpec(shape, lambda: (0,) * len(shape))


def _bn_relu(h, gamma, beta):
    """BatchNorm1d (training batch stats) folded into one scale/shift, + ReLU.

    h is the pre-activation WITHOUT the Linear bias: the bias cancels exactly
    when the batch mean is subtracted, so it is never added in the first place.
    """
    n = h.shape[0]
    inv_n = 1.0 / n
    mean = jnp.sum(h, axis=0, keepdims=True) * inv_n
    mean_sq = jnp.sum(h * h, axis=0, keepdims=True) * inv_n
    var = jnp.maximum(mean_sq - mean * mean, 0.0)     # one-pass variance, f32
    scale = gamma * jax.lax.rsqrt(var + _BN_EPS)      # (1, d_out)
    shift = beta - scale * mean                       # (1, d_out)
    return jnp.maximum(h * scale + shift, 0.0)


def _generator_kernel(x_ref,
                      w0_ref, g0_ref, b0_ref,
                      w1_ref, g1_ref, b1_ref,
                      w2_ref, g2_ref, b2_ref,
                      w3_ref, g3_ref, b3_ref,
                      wh_ref, bh_ref,
                      o_ref):
    """Whole generator forward, everything VMEM-resident, statically unrolled."""
    x = x_ref[...]
    x = _bn_relu(jnp.dot(x, w0_ref[...], preferred_element_type=jnp.float32),
                 g0_ref[...], b0_ref[...])
    x = _bn_relu(jnp.dot(x, w1_ref[...], preferred_element_type=jnp.float32),
                 g1_ref[...], b1_ref[...])
    x = _bn_relu(jnp.dot(x, w2_ref[...], preferred_element_type=jnp.float32),
                 g2_ref[...], b2_ref[...])
    x = _bn_relu(jnp.dot(x, w3_ref[...], preferred_element_type=jnp.float32),
                 g3_ref[...], b3_ref[...])
    h = jnp.dot(x, wh_ref[...], preferred_element_type=jnp.float32) + bh_ref[...]
    o_ref[...] = jax.nn.sigmoid(h)


@jax.jit
def _fused_forward(noise_p, *packed):
    """One pallas_call for the whole network. All arrays are lane-padded."""
    arrays = (noise_p,) + packed
    in_specs = [_full_spec(a.shape) for a in arrays]
    batch = noise_p.shape[0]
    d_out = packed[-1].shape[1]                        # padded im_dim (head bias)
    return pl.pallas_call(
        _generator_kernel,
        out_shape=jax.ShapeDtypeStruct((batch, d_out), jnp.float32),
        grid=(),
        in_specs=in_specs,
        out_specs=_full_spec((batch, d_out)),
        compiler_params=pltpu.CompilerParams(
            vmem_limit_bytes=32 * 1024 * 1024),        # safe on v5e/v6e/v7x
    )(*arrays)


# ----------------------------------------------------------------------------
# Parameter handling (PyTorch-shaped params -> padded, kernel-ready pack)
# ----------------------------------------------------------------------------

def init_generator_params(key, z_dim, im_dim, hidden_dim):
    """Synthetic parameters with exact PyTorch module shapes (weight = (out,in))."""
    dims = [
        (z_dim, hidden_dim),
        (hidden_dim, hidden_dim * 2),
        (hidden_dim * 2, hidden_dim * 4),
        (hidden_dim * 4, hidden_dim * 8),
    ]
    blocks = []
    for d_in, d_out in dims:
        key, kw, kb, kg, kbeta = jax.random.split(key, 5)
        w = jax.random.normal(kw, (d_out, d_in), jnp.float32) * 0.05
        b = jax.random.normal(kb, (d_out,), jnp.float32) * 0.05
        gamma = 1.0 + 0.1 * jax.random.normal(kg, (d_out,), jnp.float32)
        beta = 0.1 * jax.random.normal(kbeta, (d_out,), jnp.float32)
        blocks.append((w, b, gamma, beta))
    key, kw, kb = jax.random.split(key, 3)
    wh = jax.random.normal(kw, (im_dim, hidden_dim * 8), jnp.float32) * 0.05
    bh = jax.random.normal(kb, (im_dim,), jnp.float32) * 0.05
    return {"blocks": blocks, "head": (wh, bh)}


def pack_generator_params(params):
    """Transpose weights to (in,out) and zero-pad every feature dim to 128.

    The per-block Linear bias is intentionally dropped: BatchNorm's batch-mean
    subtraction cancels it exactly, so adding it would be wasted VPU work.
    """
    # TODO(synk): at realistic GAN sizes on v6e/v7x, store weights as bf16 and
    # keep f32 accumulation for ~2x MXU rate and half the VMEM footprint.
    packed = []
    for w, _b, gamma, beta in params["blocks"]:
        d_out, d_in = w.shape
        pi, po = _pad_to(d_in), _pad_to(d_out)
        packed.append(jnp.pad(w.T, ((0, pi - d_in), (0, po - d_out))))
        packed.append(jnp.pad(gamma.reshape(1, -1), ((0, 0), (0, po - d_out))))
        packed.append(jnp.pad(beta.reshape(1, -1), ((0, 0), (0, po - d_out))))
    wh, bh = params["head"]
    d_out, d_in = wh.shape
    pi, po = _pad_to(d_in), _pad_to(d_out)
    packed.append(jnp.pad(wh.T, ((0, pi - d_in), (0, po - d_out))))
    packed.append(jnp.pad(bh.reshape(1, -1), ((0, 0), (0, po - d_out))))
    return tuple(packed)


def generator_forward(packed_params, noise, im_dim):
    batch, z = noise.shape
    z_pad = packed_params[0].shape[0]
    noise_p = jnp.pad(noise, ((0, 0), (0, z_pad - z)))
    out_p = _fused_forward(noise_p, *packed_params)
    return out_p[:, :im_dim]


# ----------------------------------------------------------------------------
# Pure-JAX reference (full PyTorch math, bias included, two-pass variance)
# ----------------------------------------------------------------------------

def _reference_forward(params, noise):
    x = noise
    for w, b, gamma, beta in params["blocks"]:
        h = x @ w.T + b
        mean = jnp.mean(h, axis=0, keepdims=True)
        var = jnp.mean((h - mean) ** 2, axis=0, keepdims=True)
        x = jnp.maximum(gamma * (h - mean) * jax.lax.rsqrt(var + _BN_EPS) + beta, 0.0)
    wh, bh = params["head"]
    return jax.nn.sigmoid(x @ wh.T + bh)


if __name__ == "__main__":
    # Small shapes consistent with Generator(z_dim, im_dim, hidden_dim).
    batch = 8          # BN uses batch statistics; keep batch unpadded.
    z_dim = 16
    hidden_dim = 32
    im_dim = 64

    key = jax.random.PRNGKey(0)
    key_p, key_z = jax.random.split(key)
    params = init_generator_params(key_p, z_dim, im_dim, hidden_dim)
    packed = pack_generator_params(params)
    noise = jax.random.normal(key_z, (batch, z_dim), jnp.float32)

    out = generator_forward(packed, noise, im_dim)
    out = jax.block_until_ready(out)

    ref = _reference_forward(params, noise)
    assert out.shape == (batch, im_dim)
    assert jnp.allclose(out, ref, atol=1e-4, rtol=1e-4)

    print("KERNEL_OK")
</pallas_src>

<mosaic_0001>
module attributes {stable_mosaic.version = 11 : i64} {
  func.func @_generator_kernel(%arg0: memref<8x128xf32, #tpu.memory_space<vmem>>, %arg1: memref<128x128xf32, #tpu.memory_space<vmem>>, %arg2: memref<1x128xf32, #tpu.memory_space<vmem>>, %arg3: memref<1x128xf32, #tpu.memory_space<vmem>>, %arg4: memref<128x128xf32, #tpu.memory_space<vmem>>, %arg5: memref<1x128xf32, #tpu.memory_space<vmem>>, %arg6: memref<1x128xf32, #tpu.memory_space<vmem>>, %arg7: memref<128x128xf32, #tpu.memory_space<vmem>>, %arg8: memref<1x128xf32, #tpu.memory_space<vmem>>, %arg9: memref<1x128xf32, #tpu.memory_space<vmem>>, %arg10: memref<128x256xf32, #tpu.memory_space<vmem>>, %arg11: memref<1x256xf32, #tpu.memory_space<vmem>>, %arg12: memref<1x256xf32, #tpu.memory_space<vmem>>, %arg13: memref<256x128xf32, #tpu.memory_space<vmem>>, %arg14: memref<1x128xf32, #tpu.memory_space<vmem>>, %arg15: memref<8x128xf32, #tpu.memory_space<vmem>>) attributes {dimension_semantics = [], scalar_prefetch = 0 : i64, scratch_operands = 0 : i64, tpu.core_type = #tpu.core_type<tc>} {
    %c0 = arith.constant 0 : index
    %c0_0 = arith.constant 0 : index
    %0 = vector.load %arg0[%c0, %c0_0] : memref<8x128xf32, #tpu.memory_space<vmem>>, vector<8x128xf32>
    %c0_1 = arith.constant 0 : index
    %c0_2 = arith.constant 0 : index
    %1 = vector.load %arg1[%c0_1, %c0_2] : memref<128x128xf32, #tpu.memory_space<vmem>>, vector<128x128xf32>
    %cst = arith.constant dense<0.000000e+00> : vector<8x128xf32>
    %2 = tpu.matmul %0, %1, %cst {dimension_numbers = #tpu.dot_dimension_numbers<[1], [0], [0], [1], [0, 0, 1, 1], [], []>} : vector<8x128xf32>, vector<128x128xf32>, vector<8x128xf32> -> vector<8x128xf32>
    %c0_3 = arith.constant 0 : index
    %c0_4 = arith.constant 0 : index
    %3 = vector.load %arg2[%c0_3, %c0_4] : memref<1x128xf32, #tpu.memory_space<vmem>>, vector<1x128xf32>
    %c0_5 = arith.constant 0 : index
    %c0_6 = arith.constant 0 : index
    %4 = vector.load %arg3[%c0_5, %c0_6] : memref<1x128xf32, #tpu.memory_space<vmem>>, vector<1x128xf32>
    %cst_7 = arith.constant dense<0.000000e+00> : vector<128xf32>
    %5 = vector.multi_reduction <add>, %2, %cst_7 [0] : vector<8x128xf32> to vector<128xf32>
    %6 = vector.shape_cast %5 : vector<128xf32> to vector<1x128xf32>
    %cst_8 = arith.constant 1.250000e-01 : f32
    %7 = vector.broadcast %cst_8 : f32 to vector<1x128xf32>
    %8 = arith.mulf %6, %7 : vector<1x128xf32>
    %9 = arith.mulf %2, %2 : vector<8x128xf32>
    %cst_9 = arith.constant dense<0.000000e+00> : vector<128xf32>
    %10 = vector.multi_reduction <add>, %9, %cst_9 [0] : vector<8x128xf32> to vector<128xf32>
    %11 = vector.shape_cast %10 : vector<128xf32> to vector<1x128xf32>
    %cst_10 = arith.constant 1.250000e-01 : f32
    %12 = vector.broadcast %cst_10 : f32 to vector<1x128xf32>
    %13 = arith.mulf %11, %12 : vector<1x128xf32>
    %14 = arith.mulf %8, %8 : vector<1x128xf32>
    %15 = arith.subf %13, %14 : vector<1x128xf32>
    %cst_11 = arith.constant 0.000000e+00 : f32
    %16 = vector.broadcast %cst_11 : f32 to vector<1x128xf32>
    %17 = arith.maximumf %15, %16 : vector<1x128xf32>
    %cst_12 = arith.constant 9.99999974E-6 : f32
    %18 = vector.broadcast %cst_12 : f32 to vector<1x128xf32>
    %19 = arith.addf %17, %18 : vector<1x128xf32>
    %20 = math.rsqrt %19 : vector<1x128xf32>
    %21 = arith.mulf %3, %20 : vector<1x128xf32>
    %22 = arith.mulf %21, %8 : vector<1x128xf32>
    %23 = arith.subf %4, %22 : vector<1x128xf32>
    %24 = vector.broadcast %21 : vector<1x128xf32> to vector<8x128xf32>
    %25 = arith.mulf %2, %24 : vector<8x128xf32>
    %26 = vector.broadcast %23 : vector<1x128xf32> to vector<8x128xf32>
    %27 = arith.addf %25, %26 : vector<8x128xf32>
    %cst_13 = arith.constant 0.000000e+00 : f32
    %28 = vector.broadcast %cst_13 : f32 to vector<8x128xf32>
    %29 = arith.maximumf %27, %28 : vector<8x128xf32>
    %c0_14 = arith.constant 0 : index
    %c0_15 = arith.constant 0 : index
    %30 = vector.load %arg4[%c0_14, %c0_15] : memref<128x128xf32, #tpu.memory_space<vmem>>, vector<128x128xf32>
    %cst_16 = arith.constant dense<0.000000e+00> : vector<8x128xf32>
    %31 = tpu.matmul %29, %30, %cst_16 {dimension_numbers = #tpu.dot_dimension_numbers<[1], [0], [0], [1], [0, 0, 1, 1], [], []>} : vector<8x128xf32>, vector<128x128xf32>, vector<8x128xf32> -> vector<8x128xf32>
    %c0_17 = arith.constant 0 : index
    %c0_18 = arith.constant 0 : index
    %32 = vector.load %arg5[%c0_17, %c0_18] : memref<1x128xf32, #tpu.memory_space<vmem>>, vector<1x128xf32>
    %c0_19 = arith.constant 0 : index
    %c0_20 = arith.constant 0 : index
    %33 = vector.load %arg6[%c0_19, %c0_20] : memref<1x128xf32, #tpu.memory_space<vmem>>, vector<1x128xf32>
    %cst_21 = arith.constant dense<0.000000e+00> : vector<128xf32>
    %34 = vector.multi_reduction <add>, %31, %cst_21 [0] : vector<8x128xf32> to vector<128xf32>
    %35 = vector.shape_cast %34 : vector<128xf32> to vector<1x128xf32>
    %cst_22 = arith.constant 1.250000e-01 : f32
    %36 = vector.broadcast %cst_22 : f32 to vector<1x128xf32>
    %37 = arith.mulf %35, %36 : vector<1x128xf32>
    %38 = arith.mulf %31, %31 : vector<8x128xf32>
    %cst_23 = arith.constant dense<0.000000e+00> : vector<128xf32>
    %39 = vector.multi_reduction <add>, %38, %cst_23 [0] : vector<8x128xf32> to vector<128xf32>
    %40 = vector.shape_cast %39 : vector<128xf32> to vector<1x128xf32>
    %cst_24 = arith.constant 1.250000e-01 : f32
    %41 = vector.broadcast %cst_24 : f32 to vector<1x128xf32>
    %42 = arith.mulf %40, %41 : vector<1x128xf32>
    %43 = arith.mulf %37, %37 : vector<1x128xf32>
    %44 = arith.subf %42, %43 : vector<1x128xf32>
    %cst_25 = arith.constant 0.000000e+00 : f32
    %45 = vector.broadcast %cst_25 : f32 to vector<1x128xf32>
    %46 = arith.maximumf %44, %45 : vector<1x128xf32>
    %cst_26 = arith.constant 9.99999974E-6 : f32
    %47 = vector.broadcast %cst_26 : f32 to vector<1x128xf32>
    %48 = arith.addf %46, %47 : vector<1x128xf32>
    %49 = math.rsqrt %48 : vector<1x128xf32>
    %50 = arith.mulf %32, %49 : vector<1x128xf32>
    %51 = arith.mulf %50, %37 : vector<1x128xf32>
    %52 = arith.subf %33, %51 : vector<1x128xf32>
    %53 = vector.broadcast %50 : vector<1x128xf32> to vector<8x128xf32>
    %54 = arith.mulf %31, %53 : vector<8x128xf32>
    %55 = vector.broadcast %52 : vector<1x128xf32> to vector<8x128xf32>
    %56 = arith.addf %54, %55 : vector<8x128xf32>
    %cst_27 = arith.constant 0.000000e+00 : f32
    %57 = vector.broadcast %cst_27 : f32 to vector<8x128xf32>
    %58 = arith.maximumf %56, %57 : vector<8x128xf32>
    %c0_28 = arith.constant 0 : index
    %c0_29 = arith.constant 0 : index
    %59 = vector.load %arg7[%c0_28, %c0_29] : memref<128x128xf32, #tpu.memory_space<vmem>>, vector<128x128xf32>
    %cst_30 = arith.constant dense<0.000000e+00> : vector<8x128xf32>
    %60 = tpu.matmul %58, %59, %cst_30 {dimension_numbers = #tpu.dot_dimension_numbers<[1], [0], [0], [1], [0, 0, 1, 1], [], []>} : vector<8x128xf32>, vector<128x128xf32>, vector<8x128xf32> -> vector<8x128xf32>
    %c0_31 = arith.constant 0 : index
    %c0_32 = arith.constant 0 : index
    %61 = vector.load %arg8[%c0_31, %c0_32] : memref<1x128xf32, #tpu.memory_space<vmem>>, vector<1x128xf32>
    %c0_33 = arith.constant 0 : index
    %c0_34 = arith.constant 0 : index
    %62 = vector.load %arg9[%c0_33, %c0_34] : memref<1x128xf32, #tpu.memory_space<vmem>>, vector<1x128xf32>
    %cst_35 = arith.constant dense<0.000000e+00> : vector<128xf32>
    %63 = vector.multi_reduction <add>, %60, %cst_35 [0] : vector<8x128xf32> to vector<128xf32>
    %64 = vector.shape_cast %63 : vector<128xf32> to vector<1x128xf32>
    %cst_36 = arith.constant 1.250000e-01 : f32
    %65 = vector.broadcast %cst_36 : f32 to vector<1x128xf32>
    %66 = arith.mulf %64, %65 : vector<1x128xf32>
    %67 = arith.mulf %60, %60 : vector<8x128xf32>
    %cst_37 = arith.constant dense<0.000000e+00> : vector<128xf32>
    %68 = vector.multi_reduction <add>, %67, %cst_37 [0] : vector<8x128xf32> to vector<128xf32>
    %69 = vector.shape_cast %68 : vector<128xf32> to vector<1x128xf32>
    %cst_38 = arith.constant 1.250000e-01 : f32
    %70 = vector.broadcast %cst_38 : f32 to vector<1x128xf32>
    %71 = arith.mulf %69, %70 : vector<1x128xf32>
    %72 = arith.mulf %66, %66 : vector<1x128xf32>
    %73 = arith.subf %71, %72 : vector<1x128xf32>
    %cst_39 = arith.constant 0.000000e+00 : f32
    %74 = vector.broadcast %cst_39 : f32 to vector<1x128xf32>
    %75 = arith.maximumf %73, %74 : vector<1x128xf32>
    %cst_40 = arith.constant 9.99999974E-6 : f32
    %76 = vector.broadcast %cst_40 : f32 to vector<1x128xf32>
    %77 = arith.addf %75, %76 : vector<1x128xf32>
    %78 = math.rsqrt %77 : vector<1x128xf32>
    %79 = arith.mulf %61, %78 : vector<1x128xf32>
    %80 = arith.mulf %79, %66 : vector<1x128xf32>
    %81 = arith.subf %62, %80 : vector<1x128xf32>
    %82 = vector.broadcast %79 : vector<1x128xf32> to vector<8x128xf32>
    %83 = arith.mulf %60, %82 : vector<8x128xf32>
    %84 = vector.broadcast %81 : vector<1x128xf32> to vector<8x128xf32>
    %85 = arith.addf %83, %84 : vector<8x128xf32>
    %cst_41 = arith.constant 0.000000e+00 : f32
    %86 = vector.broadcast %cst_41 : f32 to vector<8x128xf32>
    %87 = arith.maximumf %85, %86 : vector<8x128xf32>
    %c0_42 = arith.constant 0 : index
    %c0_43 = arith.constant 0 : index
    %88 = vector.load %arg10[%c0_42, %c0_43] : memref<128x256xf32, #tpu.memory_space<vmem>>, vector<128x256xf32>
    %cst_44 = arith.constant dense<0.000000e+00> : vector<8x256xf32>
    %89 = tpu.matmul %87, %88, %cst_44 {dimension_numbers = #tpu.dot_dimension_numbers<[1], [0], [0], [1], [0, 0, 1, 1], [], []>} : vector<8x128xf32>, vector<128x256xf32>, vector<8x256xf32> -> vector<8x256xf32>
    %c0_45 = arith.constant 0 : index
    %c0_46 = arith.constant 0 : index
    %90 = vector.load %arg11[%c0_45, %c0_46] : memref<1x256xf32, #tpu.memory_space<vmem>>, vector<1x256xf32>
    %c0_47 = arith.constant 0 : index
    %c0_48 = arith.constant 0 : index
    %91 = vector.load %arg12[%c0_47, %c0_48] : memref<1x256xf32, #tpu.memory_space<vmem>>, vector<1x256xf32>
    %cst_49 = arith.constant dense<0.000000e+00> : vector<256xf32>
    %92 = vector.multi_reduction <add>, %89, %cst_49 [0] : vector<8x256xf32> to vector<256xf32>
    %93 = vector.shape_cast %92 : vector<256xf32> to vector<1x256xf32>
    %cst_50 = arith.constant 1.250000e-01 : f32
    %94 = vector.broadcast %cst_50 : f32 to vector<1x256xf32>
    %95 = arith.mulf %93, %94 : vector<1x256xf32>
    %96 = arith.mulf %89, %89 : vector<8x256xf32>
    %cst_51 = arith.constant dense<0.000000e+00> : vector<256xf32>
    %97 = vector.multi_reduction <add>, %96, %cst_51 [0] : vector<8x256xf32> to vector<256xf32>
    %98 = vector.shape_cast %97 : vector<256xf32> to vector<1x256xf32>
    %cst_52 = arith.constant 1.250000e-01 : f32
    %99 = vector.broadcast %cst_52 : f32 to vector<1x256xf32>
    %100 = arith.mulf %98, %99 : vector<1x256xf32>
    %101 = arith.mulf %95, %95 : vector<1x256xf32>
    %102 = arith.subf %100, %101 : vector<1x256xf32>
    %cst_53 = arith.constant 0.000000e+00 : f32
    %103 = vector.broadcast %cst_53 : f32 to vector<1x256xf32>
    %104 = arith.maximumf %102, %103 : vector<1x256xf32>
    %cst_54 = arith.constant 9.99999974E-6 : f32
    %105 = vector.broadcast %cst_54 : f32 to vector<1x256xf32>
    %106 = arith.addf %104, %105 : vector<1x256xf32>
    %107 = math.rsqrt %106 : vector<1x256xf32>
    %108 = arith.mulf %90, %107 : vector<1x256xf32>
    %109 = arith.mulf %108, %95 : vector<1x256xf32>
    %110 = arith.subf %91, %109 : vector<1x256xf32>
    %111 = vector.broadcast %108 : vector<1x256xf32> to vector<8x256xf32>
    %112 = arith.mulf %89, %111 : vector<8x256xf32>
    %113 = vector.broadcast %110 : vector<1x256xf32> to vector<8x256xf32>
    %114 = arith.addf %112, %113 : vector<8x256xf32>
    %cst_55 = arith.constant 0.000000e+00 : f32
    %115 = vector.broadcast %cst_55 : f32 to vector<8x256xf32>
    %116 = arith.maximumf %114, %115 : vector<8x256xf32>
    %c0_56 = arith.constant 0 : index
    %c0_57 = arith.constant 0 : index
    %117 = vector.load %arg13[%c0_56, %c0_57] : memref<256x128xf32, #tpu.memory_space<vmem>>, vector<256x128xf32>
    %cst_58 = arith.constant dense<0.000000e+00> : vector<8x128xf32>
    %118 = tpu.matmul %116, %117, %cst_58 {dimension_numbers = #tpu.dot_dimension_numbers<[1], [0], [0], [1], [0, 0, 1, 1], [], []>} : vector<8x256xf32>, vector<256x128xf32>, vector<8x128xf32> -> vector<8x128xf32>
    %c0_59 = arith.constant 0 : index
    %c0_60 = arith.constant 0 : index
    %119 = vector.load %arg14[%c0_59, %c0_60] : memref<1x128xf32, #tpu.memory_space<vmem>>, vector<1x128xf32>
    %120 = vector.broadcast %119 : vector<1x128xf32> to vector<8x128xf32>
    %121 = arith.addf %118, %120 : vector<8x128xf32>
    %122 = arith.negf %121 : vector<8x128xf32>
    %123 = math.exp %122 : vector<8x128xf32>
    %cst_61 = arith.constant 1.000000e+00 : f32
    %124 = vector.broadcast %cst_61 : f32 to vector<8x128xf32>
    %125 = arith.addf %124, %123 : vector<8x128xf32>
    %126 = arith.divf %124, %125 : vector<8x128xf32>
    %c0_62 = arith.constant 0 : index
    %c0_63 = arith.constant 0 : index
    %127 = vector.load %arg15[%c0_62, %c0_63] : memref<8x128xf32, #tpu.memory_space<vmem>>, vector<8x128xf32>
    tpu.vector_store %arg15[%c0_62, %c0_63], %126 {strides = array<i32>} : memref<8x128xf32, #tpu.memory_space<vmem>>, vector<8x128xf32>,
    return
  }
}

</mosaic_0001>

<llo_original>
// kernel: _fused_forward.1
$region0: #{_fused_forward.1}
  #allocation0 [shape = 'u32[]', space=smem, size = 0x4, offset = 0x4, fixed_abs, tag = 'smem constant byte address 0x4 - core index']
  #allocation1 [shape = 'u32[72,128]{1,0:T(1,128)}', space=vmem, size = 0x9000, scoped, tag = 'internal scratch']
  %s0 = inlined_call_operand.hbm [shape: f32[8,128], index: 0, kind: input, shape index: {}]
  %s1 = inlined_call_operand.hbm [shape: f32[128,128], index: 1, kind: input, shape index: {}]
  %s2 = inlined_call_operand.hbm [shape: f32[1,128], index: 2, kind: input, shape index: {}]
  %s3 = inlined_call_operand.hbm [shape: f32[1,128], index: 3, kind: input, shape index: {}]
  %s4 = inlined_call_operand.hbm [shape: f32[128,128], index: 4, kind: input, shape index: {}]
  %s5 = inlined_call_operand.hbm [shape: f32[1,128], index: 5, kind: input, shape index: {}]
  %s6 = inlined_call_operand.vmem [shape: f32[1,128], index: 6, kind: input, shape index: {}]
  %s7 = inlined_call_operand.hbm [shape: f32[128,128], index: 7, kind: input, shape index: {}]
  %s8 = inlined_call_operand.vmem [shape: f32[1,128], index: 8, kind: input, shape index: {}]
  %s9 = inlined_call_operand.vmem [shape: f32[1,128], index: 9, kind: input, shape index: {}]
  %s10 = inlined_call_operand.hbm [shape: f32[128,256], index: 10, kind: input, shape index: {}]
  %s11 = inlined_call_operand.vmem [shape: f32[1,256], index: 11, kind: input, shape index: {}]
  %s12 = inlined_call_operand.vmem [shape: f32[1,256], index: 12, kind: input, shape index: {}]
  %s13 = inlined_call_operand.hbm [shape: f32[256,128], index: 13, kind: input, shape index: {}]
  %s14 = inlined_call_operand.vmem [shape: f32[1,128], index: 14, kind: input, shape index: {}]
  %s15 = inlined_call_operand.hbm [shape: f32[8,128], index: 15, kind: output, shape index: {}]
  %s16 = sld [smem:[#allocation0]]
  $region106: #{_fused_forward.1} parent=0
    _
  %s18 = ssub.s32 1, %s16
  %s19 = scalar_select 0, %s18, %s16
  $region1: #{_fused_forward.1} parent=0
    #allocation2 [shape = 'u8[4096]{0}', space=vmem, size = 0x1000, scoped, tag = 'input window, operand 0, single buffered']
    #allocation3 [shape = 's32[1]{0}', space=sflag, size = 0x4, scoped, tag = 'scoped memory for _fused_forward.1']
    #allocation4 [shape = 's32[1]{0}', space=sflag, size = 0x4, scoped, tag = 'scoped memory for _fused_forward.1']
    #allocation5 [shape = 'u8[65536]{0}', space=vmem, size = 0x10000, scoped, tag = 'input window, operand 1, single buffered']
    #allocation6 [shape = 's32[1]{0}', space=sflag, size = 0x4, scoped, tag = 'scoped memory for _fused_forward.1']
    #allocation7 [shape = 'u8[512]{0}', space=vmem, size = 0x400, scoped, tag = 'input window, operand 2, single buffered']
    #allocation8 [shape = 'u8[512]{0}', space=vmem, size = 0x400, scoped, tag = 'input window, operand 3, single buffered']
    #allocation9 [shape = 's32[1]{0}', space=sflag, size = 0x4, scoped, tag = 'scoped memory for _fused_forward.1']
    #allocation10 [shape = 'u8[65536]{0}', space=vmem, size = 0x10000, scoped, tag = 'input window, operand 4, single buffered']
    #allocation11 [shape = 'u8[512]{0}', space=vmem, size = 0x400, scoped, tag = 'input window, operand 5, single buffered']
    #allocation12 [shape = 's32[1]{0}', space=sflag, size = 0x4, scoped, tag = 'scoped memory for _fused_forward.1']
    #allocation13 [shape = 'u8[65536]{0}', space=vmem, size = 0x10000, scoped, tag = 'input window, operand 7, single buffered']
    #allocation14 [shape = 'u8[131072]{0}', space=vmem, size = 0x20000, scoped, tag = 'input window, operand 10, single buffered']
    #allocation15 [shape = 's32[1]{0}', space=sflag, size = 0x4, scoped, tag = 'scoped memory for _fused_forward.1']
    #allocation16 [shape = 'u8[131072]{0}', space=vmem, size = 0x20000, scoped, tag = 'input window, operand 13, single buffered']
    #allocation17 [shape = 'u8[4096]{0}', space=vmem, size = 0x1000, scoped, tag = 'output window, operand 0, single buffered']
    %20 = vsyncpa [#allocation3], 0
    %21 = vsyncpa [#allocation6], 0
    %22 = vsyncpa [#allocation9], 0
    %23 = vsyncpa [#allocation12], 0
    %24 = vsyncpa [#allocation15], 0
    %25 = vsyncpa [#allocation4], 0
    // Predicated region
    $region2: #{_fused_forward.1} parent=1 // pred_check
      _
    $region3: #{_fused_forward.1} parent=1 // pred_check_branch
      %27 = sbr.rel (0) target = $region5
    $region4: #{_fused_forward.1} parent=1 // pred_region
      %29 = vsyncadd [#allocation3], 0
      %s31 = sshll.u32 %s0, 4
      %s32 = int_to_ptr.hbm [resolvable:$true] %s31
      %s33 = sshll.u32 [#allocation2], 4
      %s34 = int_to_ptr.vmem [resolvable:$true] %s33
      %36 = dma.hbm_to_vmem [thread:$0]  %s32, 128, %s34, [#allocation3]
    $region5: #{_fused_forward.1} parent=1 // pred_fallthru
      _
    // Predicated region
    $region6: #{_fused_forward.1} parent=1 // pred_check
      _
    $region7: #{_fused_forward.1} parent=1 // pred_check_branch
      %38 = sbr.rel (0) target = $region9
    $region8: #{_fused_forward.1} parent=1 // pred_region
      %40 = vsyncadd [#allocation6], 0
      %s41 = sshll.u32 %s1, 4
      %s42 = int_to_ptr.hbm [resolvable:$true] %s41
      %s43 = sshll.u32 [#allocation5], 4
      %s44 = int_to_ptr.vmem [resolvable:$true] %s43
      %49 = dma.hbm_to_vmem [thread:$0]  %s42, 2048, %s44, [#allocation6], 128, 128, 8
    $region9: #{_fused_forward.1} parent=1 // pred_fallthru
      _
    // Predicated region
    $region10: #{_fused_forward.1} parent=1 // pred_check
      _
    $region11: #{_fused_forward.1} parent=1 // pred_check_branch
      %51 = sbr.rel (0) target = $region13
    $region12: #{_fused_forward.1} parent=1 // pred_region
      %53 = vsyncadd [#allocation6], 0
      %s55 = sshll.u32 %s2, 4
      %s56 = int_to_ptr.hbm [resolvable:$true] %s55
      %s57 = sshll.u32 [#allocation7], 4
      %s58 = int_to_ptr.vmem [resolvable:$true] %s57
      %60 = dma.hbm_to_vmem [thread:$0]  %s56, 16, %s58, [#allocation6]
    $region13: #{_fused_forward.1} parent=1 // pred_fallthru
      _
    // Predicated region
    $region14: #{_fused_forward.1} parent=1 // pred_check
      _
    $region15: #{_fused_forward.1} parent=1 // pred_check_branch
      %62 = sbr.rel (0) target = $region17
    $region16: #{_fused_forward.1} parent=1 // pred_region
      %64 = vsyncadd [#allocation9], 0
      %s66 = sshll.u32 %s3, 4
      %s67 = int_to_ptr.hbm [resolvable:$true] %s66
      %s68 = sshll.u32 [#allocation8], 4
      %s69 = int_to_ptr.vmem [resolvable:$true] %s68
      %71 = dma.hbm_to_vmem [thread:$0]  %s67, 16, %s69, [#allocation9]
    $region17: #{_fused_forward.1} parent=1 // pred_fallthru
      _
    // Predicated region
    $region18: #{_fused_forward.1} parent=1 // pred_check
      _
    $region19: #{_fused_forward.1} parent=1 // pred_check_branch
      %73 = sbr.rel (0) target = $region21
    $region20: #{_fused_forward.1} parent=1 // pred_region
      %75 = vsyncadd [#allocation9], 0
      %s76 = sshll.u32 %s4, 4
      %s77 = int_to_ptr.hbm [resolvable:$true] %s76
      %s78 = sshll.u32 [#allocation10], 4
      %s79 = int_to_ptr.vmem [resolvable:$true] %s78
      %84 = dma.hbm_to_vmem [thread:$0]  %s77, 2048, %s79, [#allocation9], 128, 128, 8
    $region21: #{_fused_forward.1} parent=1 // pred_fallthru
      _
    // Predicated region
    $region22: #{_fused_forward.1} parent=1 // pred_check
      _
    $region23: #{_fused_forward.1} parent=1 // pred_check_branch
      %86 = sbr.rel (0) target = $region25
    $region24: #{_fused_forward.1} parent=1 // pred_region
      %88 = vsyncadd [#allocation12], 0
      %s90 = sshll.u32 %s5, 4
      %s91 = int_to_ptr.hbm [resolvable:$true] %s90
      %s92 = sshll.u32 [#allocation11], 4
      %s93 = int_to_ptr.vmem [resolvable:$true] %s92
      %95 = dma.hbm_to_vmem [thread:$0]  %s91, 16, %s93, [#allocation12]
    $region25: #{_fused_forward.1} parent=1 // pred_fallthru
      _
    // Predicated region
    $region26: #{_fused_forward.1} parent=1 // pred_check
      _
    $region27: #{_fused_forward.1} parent=1 // pred_check_branch
      %97 = sbr.rel (0) target = $region29
    $region28: #{_fused_forward.1} parent=1 // pred_region
      _
    $region29: #{_fused_forward.1} parent=1 // pred_fallthru
      _
    // Predicated region
    $region30: #{_fused_forward.1} parent=1 // pred_check
      _
    $region31: #{_fused_forward.1} parent=1 // pred_check_branch
      %99 = sbr.rel (0) target = $region33
    $region32: #{_fused_forward.1} parent=1 // pred_region
      %101 = vsyncadd [#allocation12], 0
      %s102 = sshll.u32 %s7, 4
      %s103 = int_to_ptr.hbm [resolvable:$true] %s102
      %s104 = sshll.u32 [#allocation13], 4
      %s105 = int_to_ptr.vmem [resolvable:$true] %s104
      %110 = dma.hbm_to_vmem [thread:$0]  %s103, 2048, %s105, [#allocation12], 128, 128, 8
    $region33: #{_fused_forward.1} parent=1 // pred_fallthru
      _
    // Predicated region
    $region34: #{_fused_forward.1} parent=1 // pred_check
      _
    $region35: #{_fused_forward.1} parent=1 // pred_check_branch
      %112 = sbr.rel (0) target = $region37
    $region36: #{_fused_forward.1} parent=1 // pred_region
      _
    $region37: #{_fused_forward.1} parent=1 // pred_fallthru
      _
    // Predicated region
    $region38: #{_fused_forward.1} parent=1 // pred_check
      _
    $region39: #{_fused_forward.1} parent=1 // pred_check_branch
      %114 = sbr.rel (0) target = $region41
    $region40: #{_fused_forward.1} parent=1 // pred_region
      _
    $region41: #{_fused_forward.1} parent=1 // pred_fallthru
      _
    // Predicated region
    $region42: #{_fused_forward.1} parent=1 // pred_check
      _
    $region43: #{_fused_forward.1} parent=1 // pred_check_branch
      %116 = sbr.rel (0) target = $region45
    $region44: #{_fused_forward.1} parent=1 // pred_region
      %118 = vsyncadd [#allocation15], 0
      %s119 = sshll.u32 %s10, 4
      %s120 = int_to_ptr.hbm [resolvable:$true] %s119
      %s121 = sshll.u32 [#allocation14], 4
      %s122 = int_to_ptr.vmem [resolvable:$true] %s121
      %127 = dma.hbm_to_vmem [thread:$0]  %s120, 4096, %s122, [#allocation15], 256, 256, 16
    $region45: #{_fused_forward.1} parent=1 // pred_fallthru
      _
    // Predicated region
    $region46: #{_fused_forward.1} parent=1 // pred_check
      _
    $region47: #{_fused_forward.1} parent=1 // pred_check_branch
      %129 = sbr.rel (0) target = $region49
    $region48: #{_fused_forward.1} parent=1 // pred_region
      _
    $region49: #{_fused_forward.1} parent=1 // pred_fallthru
      _
    // Predicated region
    $region50: #{_fused_forward.1} parent=1 // pred_check
      _
    $region51: #{_fused_forward.1} parent=1 // pred_check_branch
      %131 = sbr.rel (0) target = $region53
    $region52: #{_fused_forward.1} parent=1 // pred_region
      _
    $region53: #{_fused_forward.1} parent=1 // pred_fallthru
      _
    // Predicated region
    $region54: #{_fused_forward.1} parent=1 // pred_check
      _
    $region55: #{_fused_forward.1} parent=1 // pred_check_branch
      %133 = sbr.rel (0) target = $region57
    $region56: #{_fused_forward.1} parent=1 // pred_region
      %135 = vsyncadd [#allocation15], 0
      %s136 = sshll.u32 %s13, 4
      %s137 = int_to_ptr.hbm [resolvable:$true] %s136
      %s138 = sshll.u32 [#allocation16], 4
      %s139 = int_to_ptr.vmem [resolvable:$true] %s138
      %144 = dma.hbm_to_vmem [thread:$0]  %s137, 4096, %s139, [#allocation15], 128, 128, 8
    $region57: #{_fused_forward.1} parent=1 // pred_fallthru
      _
    // Predicated region
    $region58: #{_fused_forward.1} parent=1 // pred_check
      _
    $region59: #{_fused_forward.1} parent=1 // pred_check_branch
      %146 = sbr.rel (0) target = $region61
    $region60: #{_fused_forward.1} parent=1 // pred_region
      _
    $region61: #{_fused_forward.1} parent=1 // pred_fallthru
      _
    // Predicated region
    $region62: #{_fused_forward.1} parent=1 // pred_check
      _
    $region63: #{_fused_forward.1} parent=1 // pred_check_branch
      %148 = sbr.rel (0) target = $region65
    $region64: #{_fused_forward.1} parent=1 // pred_region
      %150 = dma.done [#allocation3], 128
    $region65: #{_fused_forward.1} parent=1 // pred_fallthru
      _
    // Predicated region
    $region66: #{_fused_forward.1} parent=1 // pred_check
      _
    $region67: #{_fused_forward.1} parent=1 // pred_check_branch
      %152 = sbr.rel (0) target = $region69
    $region68: #{_fused_forward.1} parent=1 // pred_region
      %154 = dma.done [#allocation6], 2048
    $region69: #{_fused_forward.1} parent=1 // pred_fallthru
      _
    // Predicated region
    $region70: #{_fused_forward.1} parent=1 // pred_check
      _
    $region71: #{_fused_forward.1} parent=1 // pred_check_branch
      %156 = sbr.rel (0) target = $region73
    $region72: #{_fused_forward.1} parent=1 // pred_region
      %158 = dma.done [#allocation6], 16
    $region73: #{_fused_forward.1} parent=1 // pred_fallthru
      _
    // Predicated region
    $region74: #{_fused_forward.1} parent=1 // pred_check
      _
    $region75: #{_fused_forward.1} parent=1 // pred_check_branch
      %160 = sbr.rel (0) target = $region77
    $region76: #{_fused_forward.1} parent=1 // pred_region
      %162 = dma.done [#allocation9], 16
    $region77: #{_fused_forward.1} parent=1 // pred_fallthru
      _
    // Predicated region
    $region78: #{_fused_forward.1} parent=1 // pred_check
      _
    $region79: #{_fused_forward.1} parent=1 // pred_check_branch
      %164 = sbr.rel (0) target = $region81
    $region80: #{_fused_forward.1} parent=1 // pred_region
      %166 = dma.done [#allocation9], 2048
    $region81: #{_fused_forward.1} parent=1 // pred_fallthru
      _
    // Predicated region
    $region82: #{_fused_forward.1} parent=1 // pred_check
      _
    $region83: #{_fused_forward.1} parent=1 // pred_check_branch
      %168 = sbr.rel (0) target = $region85
    $region84: #{_fused_forward.1} parent=1 // pred_region
      %170 = dma.done [#allocation12], 16
    $region85: #{_fused_forward.1} parent=1 // pred_fallthru
      _
    // Predicated region
    $region86: #{_fused_forward.1} parent=1 // pred_check
      _
    $region87: #{_fused_forward.1} parent=1 // pred_check_branch
      %172 = sbr.rel (0) target = $region89
    $region88: #{_fused_forward.1} parent=1 // pred_region
      %174 = dma.done [#allocation12], 2048
    $region89: #{_fused_forward.1} parent=1 // pred_fallthru
      _
    // Predicated region
    $region90: #{_fused_forward.1} parent=1 // pred_check
      _
    $region91: #{_fused_forward.1} parent=1 // pred_check_branch
      %176 = sbr.rel (0) target = $region93
    $region92: #{_fused_forward.1} parent=1 // pred_region
      %178 = dma.done [#allocation15], 4096
    $region93: #{_fused_forward.1} parent=1 // pred_fallthru
      _
    // Predicated region
    $region94: #{_fused_forward.1} parent=1 // pred_check
      _
    $region95: #{_fused_forward.1} parent=1 // pred_check_branch
      %180 = sbr.rel (0) target = $region97
    $region96: #{_fused_forward.1} parent=1 // pred_region
      %182 = dma.done [#allocation15], 4096
    $region97: #{_fused_forward.1} parent=1 // pred_fallthru
      _
    %v183 = vld [vmem:[#allocation2] sm:$0xff]
    %v184 = vld [vmem:[#allocation5] sm:$0xff]
    %v185 = vld [vmem:[#allocation5 + $0x8] sm:$0xff]
    %v186 = vld [vmem:[#allocation5 + $0x10] sm:$0xff]
    %v187 = vld [vmem:[#allocation5 + $0x18] sm:$0xff]
    %v188 = vld [vmem:[#allocation5 + $0x20] sm:$0xff]
    %v189 = vld [vmem:[#allocation5 + $0x28] sm:$0xff]
    %v190 = vld [vmem:[#allocation5 + $0x30] sm:$0xff]
    %v191 = vld [vmem:[#allocation5 + $0x38] sm:$0xff]
    %v192 = vld [vmem:[#allocation5 + $0x40] sm:$0xff]
    %v193 = vld [vmem:[#allocation5 + $0x48] sm:$0xff]
    %v194 = vld [vmem:[#allocation5 + $0x50] sm:$0xff]
    %v195 = vld [vmem:[#allocation5 + $0x58] sm:$0xff]
    %v196 = vld [vmem:[#allocation5 + $0x60] sm:$0xff]
    %v197 = vld [vmem:[#allocation5 + $0x68] sm:$0xff]
    %v198 = vld [vmem:[#allocation5 + $0x70] sm:$0xff]
    %v199 = vld [vmem:[#allocation5 + $0x78] sm:$0xff]
    %200 = vmatpush.msra.mxu0 %v199
    %201 = vmatpush.msra.mxu0 %v198
    %202 = vmatpush.msra.mxu0 %v197
    %203 = vmatpush.msra.mxu0 %v196
    %204 = vmatpush.msra.mxu0 %v195
    %205 = vmatpush.msra.mxu0 %v194
    %206 = vmatpush.msra.mxu0 %v193
    %207 = vmatpush.msra.mxu0 %v192
    %208 = vmatpush.msra.mxu0 %v191
    %209 = vmatpush.msra.mxu0 %v190
    %210 = vmatpush.msra.mxu0 %v189
    %211 = vmatpush.msra.mxu0 %v188
    %212 = vmatpush.msra.mxu0 %v187
    %213 = vmatpush.msra.mxu0 %v186
    %214 = vmatpush.msra.mxu0 %v185
    %215 = vmatpush.msra.mxu0 %v184
    %216 = vmatmul.f32.gmra.mxu0 %v183
    %v217 = vpop.f32.mrf.mxu0
    %v218 = vadd.f32 0.0, %v217
    %219 = vdwg.mxu0
    %v220 = vld [vmem:[#allocation7] sm:$0x1]
    %v221 = vld [vmem:[#allocation8] sm:$0x1]
    %v222 = vrot.slane %v218, 4
    %v223 = vadd.f32 %v218, %v222
    %v224 = vrot.slane %v223, 2
    %v225 = vadd.f32 %v223, %v224
    %v226 = vrot.slane %v225, 1
    %v227 = vadd.f32 %v225, %v226
    %v228 = vmul.f32 %v227, 0.125
    %v229 = vmul.f32 %v218, %v218
    %v230 = vrot.slane %v229, 4
    %v231 = vadd.f32 %v229, %v230
    %v232 = vrot.slane %v231, 2
    %v233 = vadd.f32 %v231, %v232
    %v234 = vrot.slane %v233, 1
    %v235 = vadd.f32 %v233, %v234
    %v236 = vmul.f32 %v235, 0.125
    %v237 = vmul.f32 %v228, %v228
    %v238 = vsub.f32 %v236, %v237
    %v239 = vmax.f32 %v238, 0.0
    %v240 = vadd.f32 %v239, 1e-05
    %v241 = vrsqrt.pop %v240
    %v242 = vmul.f32 %v241, %v240
    %v243 = vmul.f32 %v242, %v241
    %v244 = vmul.f32 0.5, %v243
    %v245 = vsub.f32 1.5, %v244
    %v246 = vmul.f32 %v241, %v245
    %vm247 = vweird.f32 %v240
    %vm248 = vweird.f32 %v241
    %vm249 = vmor %vm247, %vm248
    %v250 = vsel %vm249, %v241, %v246
    %v251 = vmul.f32 %v220, %v250
    %v252 = vmul.f32 %v251, %v228
    %v253 = vsub.f32 %v221, %v252
    %v255 = vperm.slane %v251, 0
    %v257 = vmul.f32 %v218, %v255
    %v259 = vperm.slane %v253, 0
    %v261 = vadd.f32 %v257, %v259
    %v262 = vmax.f32 %v261, 0.0
    %v263 = vld [vmem:[#allocation10] sm:$0xff]
    %v264 = vld [vmem:[#allocation10 + $0x8] sm:$0xff]
    %v265 = vld [vmem:[#allocation10 + $0x10] sm:$0xff]
    %v266 = vld [vmem:[#allocation10 + $0x18] sm:$0xff]
    %v267 = vld [vmem:[#allocation10 + $0x20] sm:$0xff]
    %v268 = vld [vmem:[#allocation10 + $0x28] sm:$0xff]
    %v269 = vld [vmem:[#allocation10 + $0x30] sm:$0xff]
    %v270 = vld [vmem:[#allocation10 + $0x38] sm:$0xff]
    %v271 = vld [vmem:[#allocation10 + $0x40] sm:$0xff]
    %v272 = vld [vmem:[#allocation10 + $0x48] sm:$0xff]
    %v273 = vld [vmem:[#allocation10 + $0x50] sm:$0xff]
    %v274 = vld [vmem:[#allocation10 + $0x58] sm:$0xff]
    %v275 = vld [vmem:[#allocation10 + $0x60] sm:$0xff]
    %v276 = vld [vmem:[#allocation10 + $0x68] sm:$0xff]
    %v277 = vld [vmem:[#allocation10 + $0x70] sm:$0xff]
    %v278 = vld [vmem:[#allocation10 + $0x78] sm:$0xff]
    %279 = vmatpush.msra.mxu0 %v278
    %280 = vmatpush.msra.mxu0 %v277
    %281 = vmatpush.msra.mxu0 %v276
    %282 = vmatpush.msra.mxu0 %v275
    %283 = vmatpush.msra.mxu0 %v274
    %284 = vmatpush.msra.mxu0 %v273
    %285 = vmatpush.msra.mxu0 %v272
    %286 = vmatpush.msra.mxu0 %v271
    %287 = vmatpush.msra.mxu0 %v270
    %288 = vmatpush.msra.mxu0 %v269
    %289 = vmatpush.msra.mxu0 %v268
    %290 = vmatpush.msra.mxu0 %v267
    %291 = vmatpush.msra.mxu0 %v266
    %292 = vmatpush.msra.mxu0 %v265
    %293 = vmatpush.msra.mxu0 %v264
    %294 = vmatpush.msra.mxu0 %v263
    %295 = vmatmul.f32.gmra.mxu0 %v262
    %v296 = vpop.f32.mrf.mxu0
    %v297 = vadd.f32 0.0, %v296
    %298 = vdwg.mxu0
    %v299 = vld [vmem:[#allocation11] sm:$0x1]
    %v300 = vld [vmem:[%s6] sm:$0x1]
    %v301 = vrot.slane %v297, 4
    %v302 = vadd.f32 %v297, %v301
    %v303 = vrot.slane %v302, 2
    %v304 = vadd.f32 %v302, %v303
    %v305 = vrot.slane %v304, 1
    %v306 = vadd.f32 %v304, %v305
    %v307 = vmul.f32 %v306, 0.125
    %v308 = vmul.f32 %v297, %v297
    %v309 = vrot.slane %v308, 4
    %v310 = vadd.f32 %v308, %v309
    %v311 = vrot.slane %v310, 2
    %v312 = vadd.f32 %v310, %v311
    %v313 = vrot.slane %v312, 1
    %v314 = vadd.f32 %v312, %v313
    %v315 = vmul.f32 %v314, 0.125
    %v316 = vmul.f32 %v307, %v307
    %v317 = vsub.f32 %v315, %v316
    %v318 = vmax.f32 %v317, 0.0
    %v319 = vadd.f32 %v318, 1e-05
    %v320 = vrsqrt.pop %v319
    %v321 = vmul.f32 %v320, %v319
    %v322 = vmul.f32 %v321, %v320
    %v323 = vmul.f32 0.5, %v322
    %v324 = vsub.f32 1.5, %v323
    %v325 = vmul.f32 %v320, %v324
    %vm326 = vweird.f32 %v319
    %vm327 = vweird.f32 %v320
    %vm328 = vmor %vm326, %vm327
    %v329 = vsel %vm328, %v320, %v325
    %v330 = vmul.f32 %v299, %v329
    %v331 = vmul.f32 %v330, %v307
    %v332 = vsub.f32 %v300, %v331
    %v334 = vperm.slane %v330, 0
    %v336 = vmul.f32 %v297, %v334
    %v338 = vperm.slane %v332, 0
    %v340 = vadd.f32 %v336, %v338
    %v341 = vmax.f32 %v340, 0.0
    %v342 = vld [vmem:[#allocation13] sm:$0xff]
    %v343 = vld [vmem:[#allocation13 + $0x8] sm:$0xff]
    %v344 = vld [vmem:[#allocation13 + $0x10] sm:$0xff]
    %v345 = vld [vmem:[#allocation13 + $0x18] sm:$0xff]
    %v346 = vld [vmem:[#allocation13 + $0x20] sm:$0xff]
    %v347 = vld [vmem:[#allocation13 + $0x28] sm:$0xff]
    %v348 = vld [vmem:[#allocation13 + $0x30] sm:$0xff]
    %v349 = vld [vmem:[#allocation13 + $0x38] sm:$0xff]
    %v350 = vld [vmem:[#allocation13 + $0x40] sm:$0xff]
    %v351 = vld [vmem:[#allocation13 + $0x48] sm:$0xff]
    %v352 = vld [vmem:[#allocation13 + $0x50] sm:$0xff]
    %v353 = vld [vmem:[#allocation13 + $0x58] sm:$0xff]
    %v354 = vld [vmem:[#allocation13 + $0x60] sm:$0xff]
    %v355 = vld [vmem:[#allocation13 + $0x68] sm:$0xff]
    %v356 = vld [vmem:[#allocation13 + $0x70] sm:$0xff]
    %v357 = vld [vmem:[#allocation13 + $0x78] sm:$0xff]
    %358 = vmatpush.msra.mxu0 %v357
    %359 = vmatpush.msra.mxu0 %v356
    %360 = vmatpush.msra.mxu0 %v355
    %361 = vmatpush.msra.mxu0 %v354
    %362 = vmatpush.msra.mxu0 %v353
    %363 = vmatpush.msra.mxu0 %v352
    %364 = vmatpush.msra.mxu0 %v351
    %365 = vmatpush.msra.mxu0 %v350
    %366 = vmatpush.msra.mxu0 %v349
    %367 = vmatpush.msra.mxu0 %v348
    %368 = vmatpush.msra.mxu0 %v347
    %369 = vmatpush.msra.mxu0 %v346
    %370 = vmatpush.msra.mxu0 %v345
    %371 = vmatpush.msra.mxu0 %v344
    %372 = vmatpush.msra.mxu0 %v343
    %373 = vmatpush.msra.mxu0 %v342
    %374 = vmatmul.f32.gmra.mxu0 %v341
    %v375 = vpop.f32.mrf.mxu0
    %v376 = vadd.f32 0.0, %v375
    %377 = vdwg.mxu0
    %v378 = vld [vmem:[%s8] sm:$0x1]
    %v379 = vld [vmem:[%s9] sm:$0x1]
    %v380 = vrot.slane %v376, 4
    %v381 = vadd.f32 %v376, %v380
    %v382 = vrot.slane %v381, 2
    %v383 = vadd.f32 %v381, %v382
    %v384 = vrot.slane %v383, 1
    %v385 = vadd.f32 %v383, %v384
    %v386 = vmul.f32 %v385, 0.125
    %v387 = vmul.f32 %v376, %v376
    %v388 = vrot.slane %v387, 4
    %v389 = vadd.f32 %v387, %v388
    %v390 = vrot.slane %v389, 2
    %v391 = vadd.f32 %v389, %v390
    %v392 = vrot.slane %v391, 1
    %v393 = vadd.f32 %v391, %v392
    %v394 = vmul.f32 %v393, 0.125
    %v395 = vmul.f32 %v386, %v386
    %v396 = vsub.f32 %v394, %v395
    %v397 = vmax.f32 %v396, 0.0
    %v398 = vadd.f32 %v397, 1e-05
    %v399 = vrsqrt.pop %v398
    %v400 = vmul.f32 %v399, %v398
    %v401 = vmul.f32 %v400, %v399
    %v402 = vmul.f32 0.5, %v401
    %v403 = vsub.f32 1.5, %v402
    %v404 = vmul.f32 %v399, %v403
    %vm405 = vweird.f32 %v398
    %vm406 = vweird.f32 %v399
    %vm407 = vmor %vm405, %vm406
    %v408 = vsel %vm407, %v399, %v404
    %v409 = vmul.f32 %v378, %v408
    %v410 = vmul.f32 %v409, %v386
    %v411 = vsub.f32 %v379, %v410
    %v413 = vperm.slane %v409, 0
    %v415 = vmul.f32 %v376, %v413
    %v417 = vperm.slane %v411, 0
    %v419 = vadd.f32 %v415, %v417
    %v420 = vmax.f32 %v419, 0.0
    %v421 = vld [vmem:[#allocation14] sm:$0xff]
    %v422 = vld [vmem:[#allocation14 + $0x8] sm:$0xff]
    %v423 = vld [vmem:[#allocation14 + $0x10] sm:$0xff]
    %v424 = vld [vmem:[#allocation14 + $0x18] sm:$0xff]
    %v425 = vld [vmem:[#allocation14 + $0x20] sm:$0xff]
    %v426 = vld [vmem:[#allocation14 + $0x28] sm:$0xff]
    %v427 = vld [vmem:[#allocation14 + $0x30] sm:$0xff]
    %v428 = vld [vmem:[#allocation14 + $0x38] sm:$0xff]
    %v429 = vld [vmem:[#allocation14 + $0x40] sm:$0xff]
    %v430 = vld [vmem:[#allocation14 + $0x48] sm:$0xff]
    %v431 = vld [vmem:[#allocation14 + $0x50] sm:$0xff]
    %v432 = vld [vmem:[#allocation14 + $0x58] sm:$0xff]
    %v433 = vld [vmem:[#allocation14 + $0x60] sm:$0xff]
    %v434 = vld [vmem:[#allocation14 + $0x68] sm:$0xff]
    %v435 = vld [vmem:[#allocation14 + $0x70] sm:$0xff]
    %v436 = vld [vmem:[#allocation14 + $0x78] sm:$0xff]
    %v437 = vld [vmem:[#allocation14 + $0x80] sm:$0xff]
    %v438 = vld [vmem:[#allocation14 + $0x88] sm:$0xff]
    %v439 = vld [vmem:[#allocation14 + $0x90] sm:$0xff]
    %v440 = vld [vmem:[#allocation14 + $0x98] sm:$0xff]
    %v441 = vld [vmem:[#allocation14 + $0xa0] sm:$0xff]
    %v442 = vld [vmem:[#allocation14 + $0xa8] sm:$0xff]
    %v443 = vld [vmem:[#allocation14 + $0xb0] sm:$0xff]
    %v444 = vld [vmem:[#allocation14 + $0xb8] sm:$0xff]
    %v445 = vld [vmem:[#allocation14 + $0xc0] sm:$0xff]
    %v446 = vld [vmem:[#allocation14 + $0xc8] sm:$0xff]
    %v447 = vld [vmem:[#allocation14 + $0xd0] sm:$0xff]
    %v448 = vld [vmem:[#allocation14 + $0xd8] sm:$0xff]
    %v449 = vld [vmem:[#allocation14 + $0xe0] sm:$0xff]
    %v450 = vld [vmem:[#allocation14 + $0xe8] sm:$0xff]
    %v451 = vld [vmem:[#allocation14 + $0xf0] sm:$0xff]
    %v452 = vld [vmem:[#allocation14 + $0xf8] sm:$0xff]
    %453 = vmatpush.msra.mxu0 %v451
    %454 = vmatpush.msra.mxu0 %v449
    %455 = vmatpush.msra.mxu0 %v447
    %456 = vmatpush.msra.mxu0 %v445
    %457 = vmatpush.msra.mxu0 %v443
    %458 = vmatpush.msra.mxu0 %v441
    %459 = vmatpush.msra.mxu0 %v439
    %460 = vmatpush.msra.mxu0 %v437
    %461 = vmatpush.msra.mxu0 %v435
    %462 = vmatpush.msra.mxu0 %v433
    %463 = vmatpush.msra.mxu0 %v431
    %464 = vmatpush.msra.mxu0 %v429
    %465 = vmatpush.msra.mxu0 %v427
    %466 = vmatpush.msra.mxu0 %v425
    %467 = vmatpush.msra.mxu0 %v423
    %468 = vmatpush.msra.mxu0 %v421
    %469 = vmatmul.f32.gmra.mxu0 %v420
    %v470 = vpop.f32.mrf.mxu0
    %v471 = vadd.f32 0.0, %v470
    %472 = vdwg.mxu0
    %473 = vmatpush.msra.mxu0 %v452
    %474 = vmatpush.msra.mxu0 %v450
    %475 = vmatpush.msra.mxu0 %v448
    %476 = vmatpush.msra.mxu0 %v446
    %477 = vmatpush.msra.mxu0 %v444
    %478 = vmatpush.msra.mxu0 %v442
    %479 = vmatpush.msra.mxu0 %v440
    %480 = vmatpush.msra.mxu0 %v438
    %481 = vmatpush.msra.mxu0 %v436
    %482 = vmatpush.msra.mxu0 %v434
    %483 = vmatpush.msra.mxu0 %v432
    %484 = vmatpush.msra.mxu0 %v430
    %485 = vmatpush.msra.mxu0 %v428
    %486 = vmatpush.msra.mxu0 %v426
    %487 = vmatpush.msra.mxu0 %v424
    %488 = vmatpush.msra.mxu0 %v422
    %489 = vmatmul.f32.gmra.mxu0 %v420
    %v490 = vpop.f32.mrf.mxu0
    %v491 = vadd.f32 0.0, %v490
    %492 = vdwg.mxu0
    %v493 = vld [vmem:[%s11] sm:$0x3]
    %v494 = vld [vmem:[%s12] sm:$0x3]
    %v495 = vrot.slane %v471, 4
    %v496 = vadd.f32 %v471, %v495
    %v497 = vrot.slane %v496, 2
    %v498 = vadd.f32 %v496, %v497
    %v499 = vrot.slane %v498, 1
    %v500 = vadd.f32 %v498, %v499
    %v501 = vrot.slane %v491, 4
    %v502 = vadd.f32 %v491, %v501
    %v503 = vrot.slane %v502, 2
    %v504 = vadd.f32 %v502, %v503
    %v505 = vrot.slane %v504, 1
    %v506 = vadd.f32 %v504, %v505
    %v507 = vmul.f32 %v500, 0.125
    %v508 = vmul.f32 %v506, 0.125
    %v509 = vmul.f32 %v471, %v471
    %v510 = vmul.f32 %v491, %v491
    %v511 = vrot.slane %v509, 4
    %v512 = vadd.f32 %v509, %v511
    %v513 = vrot.slane %v512, 2
    %v514 = vadd.f32 %v512, %v513
    %v515 = vrot.slane %v514, 1
    %v516 = vadd.f32 %v514, %v515
    %v517 = vrot.slane %v510, 4
    %v518 = vadd.f32 %v510, %v517
    %v519 = vrot.slane %v518, 2
    %v520 = vadd.f32 %v518, %v519
    %v521 = vrot.slane %v520, 1
    %v522 = vadd.f32 %v520, %v521
    %v523 = vmul.f32 %v516, 0.125
    %v524 = vmul.f32 %v522, 0.125
    %v525 = vmul.f32 %v507, %v507
    %v526 = vmul.f32 %v508, %v508
    %v527 = vsub.f32 %v523, %v525
    %v528 = vsub.f32 %v524, %v526
    %v529 = vmax.f32 %v527, 0.0
    %v530 = vmax.f32 %v528, 0.0
    %v531 = vadd.f32 %v529, 1e-05
    %v532 = vadd.f32 %v530, 1e-05
    %v533 = vrsqrt.pop %v531
    %v534 = vmul.f32 %v533, %v531
    %v535 = vmul.f32 %v534, %v533
    %v536 = vmul.f32 0.5, %v535
    %v537 = vsub.f32 1.5, %v536
    %v538 = vmul.f32 %v533, %v537
    %vm539 = vweird.f32 %v531
    %vm540 = vweird.f32 %v533
    %vm541 = vmor %vm539, %vm540
    %v542 = vsel %vm541, %v533, %v538
    %v543 = vrsqrt.pop %v532
    %v544 = vmul.f32 %v543, %v532
    %v545 = vmul.f32 %v544, %v543
    %v546 = vmul.f32 0.5, %v545
    %v547 = vsub.f32 1.5, %v546
    %v548 = vmul.f32 %v543, %v547
    %vm549 = vweird.f32 %v532
    %vm550 = vweird.f32 %v543
    %vm551 = vmor %vm549, %vm550
    %v552 = vsel %vm551, %v543, %v548
    %v555 = vrot.slane %v552, 7
    %vm556 = vcmask 1040384
    %v557 = vsel %vm556, %v542, %v555
    %v559 = vmul.f32 %v493, %v557
    %v562 = vrot.slane %v508, 7
    %v563 = vsel %vm556, %v507, %v562
    %v565 = vmul.f32 %v559, %v563
    %v566 = vsub.f32 %v494, %v565
    %v568 = vperm.slane %v559, 0
    %v569 = vperm.slane %v559, 1
    %v572 = vmul.f32 %v471, %v568
    %v573 = vmul.f32 %v491, %v569
    %v575 = vperm.slane %v566, 0
    %v576 = vperm.slane %v566, 1
    %v579 = vadd.f32 %v572, %v575
    %v580 = vadd.f32 %v573, %v576
    %v581 = vmax.f32 %v579, 0.0
    %v582 = vmax.f32 %v580, 0.0
    %v583 = vld [vmem:[#allocation16] sm:$0xff]
    %v584 = vld [vmem:[#allocation16 + $0x8] sm:$0xff]
    %v585 = vld [vmem:[#allocation16 + $0x10] sm:$0xff]
    %v586 = vld [vmem:[#allocation16 + $0x18] sm:$0xff]
    %v587 = vld [vmem:[#allocation16 + $0x20] sm:$0xff]
    %v588 = vld [vmem:[#allocation16 + $0x28] sm:$0xff]
    %v589 = vld [vmem:[#allocation16 + $0x30] sm:$0xff]
    %v590 = vld [vmem:[#allocation16 + $0x38] sm:$0xff]
    %v591 = vld [vmem:[#allocation16 + $0x40] sm:$0xff]
    %v592 = vld [vmem:[#allocation16 + $0x48] sm:$0xff]
    %v593 = vld [vmem:[#allocation16 + $0x50] sm:$0xff]
    %v594 = vld [vmem:[#allocation16 + $0x58] sm:$0xff]
    %v595 = vld [vmem:[#allocation16 + $0x60] sm:$0xff]
    %v596 = vld [vmem:[#allocation16 + $0x68] sm:$0xff]
    %v597 = vld [vmem:[#allocation16 + $0x70] sm:$0xff]
    %v598 = vld [vmem:[#allocation16 + $0x78] sm:$0xff]
    %v599 = vld [vmem:[#allocation16 + $0x80] sm:$0xff]
    %v600 = vld [vmem:[#allocation16 + $0x88] sm:$0xff]
    %v601 = vld [vmem:[#allocation16 + $0x90] sm:$0xff]
    %v602 = vld [vmem:[#allocation16 + $0x98] sm:$0xff]
    %v603 = vld [vmem:[#allocation16 + $0xa0] sm:$0xff]
    %v604 = vld [vmem:[#allocation16 + $0xa8] sm:$0xff]
    %v605 = vld [vmem:[#allocation16 + $0xb0] sm:$0xff]
    %v606 = vld [vmem:[#allocation16 + $0xb8] sm:$0xff]
    %v607 = vld [vmem:[#allocation16 + $0xc0] sm:$0xff]
    %v608 = vld [vmem:[#allocation16 + $0xc8] sm:$0xff]
    %v609 = vld [vmem:[#allocation16 + $0xd0] sm:$0xff]
    %v610 = vld [vmem:[#allocation16 + $0xd8] sm:$0xff]
    %v611 = vld [vmem:[#allocation16 + $0xe0] sm:$0xff]
    %v612 = vld [vmem:[#allocation16 + $0xe8] sm:$0xff]
    %v613 = vld [vmem:[#allocation16 + $0xf0] sm:$0xff]
    %v614 = vld [vmem:[#allocation16 + $0xf8] sm:$0xff]
    %v615 = vld [vmem:[%s14] sm:$0x1]
    %v617 = vperm.slane %v615, 0
    %619 = vmatpush.msra.mxu0 %v598
    %620 = vmatpush.msra.mxu0 %v597
    %621 = vmatpush.msra.mxu0 %v596
    %622 = vmatpush.msra.mxu0 %v595
    %623 = vmatpush.msra.mxu0 %v594
    %624 = vmatpush.msra.mxu0 %v593
    %625 = vmatpush.msra.mxu0 %v592
    %626 = vmatpush.msra.mxu0 %v591
    %627 = vmatpush.msra.mxu0 %v590
    %628 = vmatpush.msra.mxu0 %v589
    %629 = vmatpush.msra.mxu0 %v588
    %630 = vmatpush.msra.mxu0 %v587
    %631 = vmatpush.msra.mxu0 %v586
    %632 = vmatpush.msra.mxu0 %v585
    %633 = vmatpush.msra.mxu0 %v584
    %634 = vmatpush.msra.mxu0 %v583
    %635 = vmatmul.f32.gmra.mxu0 %v581
    %v636 = vpop.f32.mrf.mxu0
    %v637 = vadd.f32 %v617, %v636
    %638 = vdwg.mxu0
    %639 = vmatpush.msra.mxu0 %v614
    %640 = vmatpush.msra.mxu0 %v613
    %641 = vmatpush.msra.mxu0 %v612
    %642 = vmatpush.msra.mxu0 %v611
    %643 = vmatpush.msra.mxu0 %v610
    %644 = vmatpush.msra.mxu0 %v609
    %645 = vmatpush.msra.mxu0 %v608
    %646 = vmatpush.msra.mxu0 %v607
    %647 = vmatpush.msra.mxu0 %v606
    %648 = vmatpush.msra.mxu0 %v605
    %649 = vmatpush.msra.mxu0 %v604
    %650 = vmatpush.msra.mxu0 %v603
    %651 = vmatpush.msra.mxu0 %v602
    %652 = vmatpush.msra.mxu0 %v601
    %653 = vmatpush.msra.mxu0 %v600
    %654 = vmatpush.msra.mxu0 %v599
    %655 = vmatmul.f32.gmra.mxu0 %v582
    %v656 = vpop.f32.mrf.mxu0
    %v657 = vadd.f32 %v637, %v656
    %658 = vdwg.mxu0
    %v659 = vxor.u32 %v657, 2147483648
    %v660 = vmul.f32 %v659, 1.442695
    %v661 = vpow.pop %v660
    %v662 = vadd.f32 %v661, 1.0
    %v663 = vrcp.pop %v662
    %v664 = vmul.f32 %v662, %v663
    %v665 = vsub.f32 1.0, %v664
    %v666 = vmul.f32 %v663, %v665
    %v667 = vadd.f32 %v663, %v666
    %vm668 = vweird.f32 %v662
    %vm669 = vweird.f32 %v663
    %vm670 = vmor %vm668, %vm669
    %v671 = vsel %vm670, %v663, %v667
    %v672 = vand.u32 2147483647, %v662
    %vm673 = vcmp.eq.f32.partialorder %v672, 8.507059e+37
    %v674 = vand.u32 %v662, 2147483648
    %v675 = vor.u32 1.1754944e-38, %v674
    %v676 = vsel %vm673, %v675, %v671
    %v677 = vmul.f32 1.0, %v676
    %678 = vst [vmem:[#allocation17] sm:$0xff] %v677
    // Predicated region
    $region98: #{_fused_forward.1} parent=1 // pred_check
      _
    $region99: #{_fused_forward.1} parent=1 // pred_check_branch
      %680 = sbr.rel (0) target = $region101
    $region100: #{_fused_forward.1} parent=1 // pred_region
      %682 = vsyncadd [#allocation4], 0
      %s684 = sshll.u32 [#allocation17], 4
      %s685 = int_to_ptr.vmem [resolvable:$true] %s684
      %s686 = sshll.u32 %s15, 4
      %s687 = int_to_ptr.hbm [resolvable:$true] %s686
      %689 = dma.vmem_to_hbm [thread:$0]  %s685, 128, %s687, [#allocation4]
    $region101: #{_fused_forward.1} parent=1 // pred_fallthru
      _
    // Predicated region
    $region102: #{_fused_forward.1} parent=1 // pred_check
      _
    $region103: #{_fused_forward.1} parent=1 // pred_check_branch
      %691 = sbr.rel (0) target = $region105
    $region104: #{_fused_forward.1} parent=1 // pred_region
      %693 = dma.done [#allocation4], 128
    $region105: #{_fused_forward.1} parent=1 // pred_fallthru
      _
    %694 = vsyncpa [#allocation3], 1
    %695 = vsyncpa [#allocation6], 1
    %696 = vsyncpa [#allocation9], 1
    %697 = vsyncpa [#allocation12], 1
    %698 = vsyncpa [#allocation15], 1
    %699 = vsyncpa [#allocation4], 1

</llo_original>
